<compile_context>
chip_gen: v7x
topology: tpu7x:2x2x1
jax: 0.10.0
libtpu: 0.0.40
codegen_flags: <defaults>
</compile_context>

<pallas_src>
import jax
import jax.numpy as jnp
from jax.experimental import pallas as pl
from jax.experimental.pallas import tpu as pltpu


_TARGET_X_BLOCK_BYTES = 4 << 20   # aim ~4 MiB of x per grid step (2-8 MiB window)
_PIPE_VMEM_BUDGET = 32 << 20      # double-buffered x + out + accumulator
_VMEM_LIMIT_BYTES = 48 << 20      # scoped VMEM limit (safe on v7x's 64 MiB)
_MAX_TB = 32768


def _round8_down(n):
    return max(8, (n // 8) * 8)


def _choose_tiles(B, K):
    """Pick (tb, tk): batch rows per block and K columns per block."""
    # --- K tiling: only when a full-K row block cannot reach a useful tb. ---
    tk = K
    if 2 * 512 * 4 * K > _PIPE_VMEM_BUDGET and K % 128 == 0:
        for cand in (4096, 2048, 1024, 512, 256, 128):
            if K % cand == 0:
                tk = cand
                break
    # TODO(synk): a huge K that is not a multiple of 128 stays untiled; pad K
    # (x and w_sum) in the wrapper if such shapes ever matter.
    nk = K // tk if K % tk == 0 else 1

    # --- batch tiling: target ~4 MiB of x per step, bounded by VMEM. ---
    x_row = 2 * 4 * tk                   # double-buffered f32 input rows
    out_row = 2 * 4 * 128                # (tb, 1) output is lane-padded to 128
    acc_row = 4 * 128 if nk > 1 else 0   # f32 accumulator scratch
    per_row = x_row + out_row + acc_row
    tb_budget = max(8, _PIPE_VMEM_BUDGET // per_row)
    tb_target = max(8, _TARGET_X_BLOCK_BYTES // (4 * tk))

    if B < 8:
        tb = B                           # full-dim block; (8,128) rule satisfied
    else:
        tb = _round8_down(min(tb_budget, tb_target, _MAX_TB, _round8_down(B)))
        # v7x megacore: split a single-block batch so both TensorCores get work.
        if tb >= B and 4 * B * K >= (2 << 20):
            tb = _round8_down((B + 1) // 2)
    return tb, tk


def _rowsum_kernel(x_ref, ws_ref, o_ref):
    # x_ref: (tb, K); ws_ref: (1, K) pre-scaled f32; o_ref: (tb, 1)
    p = x_ref[...].astype(jnp.float32) * ws_ref[...]
    o_ref[...] = jnp.sum(p, axis=1, keepdims=True).astype(o_ref.dtype)


def _rowsum_kernel_ktiled(x_ref, ws_ref, o_ref, acc_ref):
    # x_ref: (tb, tk) with tk % 128 == 0; acc_ref: (tb, 128) f32 scratch.
    k = pl.program_id(1)

    @pl.when(k == 0)
    def _init():
        acc_ref[...] = jnp.zeros_like(acc_ref)

    p = x_ref[...].astype(jnp.float32) * ws_ref[...]          # (tb, tk) VPU
    tk = p.shape[1]
    part = p[:, 0:128]
    for c in range(1, tk // 128):                             # lane-tile folds (VPU adds)
        part = part + p[:, c * 128:(c + 1) * 128]
    acc_ref[...] += part

    @pl.when(k == pl.num_programs(1) - 1)
    def _finalize():
        # Single cross-lane (XLU) reduction per row block.
        o_ref[...] = jnp.sum(acc_ref[...], axis=1, keepdims=True).astype(o_ref.dtype)


def fused_matmul_sum_scale(x, w, scaling_factor, *, block_rows=None, block_k=None):
    """x: (B, K), w: (H, K) -> (B, 1); matches the PyTorch Model.forward."""
    B, K = x.shape
    H, K2 = w.shape
    assert K == K2

    # One-time prologue (plain JAX, fused by XLA): fold the H-sum, the /2 and
    # the scaling factor into a single (1, K) f32 vector.
    scale = jnp.asarray(scaling_factor, jnp.float32) * 0.5
    w_sum = jnp.sum(w.astype(jnp.float32), axis=0, keepdims=True) * scale

    tb, tk = _choose_tiles(B, K)
    if block_rows is not None:
        tb = block_rows
    if block_k is not None:
        tk = block_k

    nt = pl.cdiv(B, tb)
    nk = pl.cdiv(K, tk)
    cost = pl.CostEstimate(flops=2 * B * K, transcendentals=0,
                           bytes_accessed=4 * B * K + 4 * K + 4 * B)

    if nk == 1:
        # Single K block per row block: direct multiply + lane reduction.
        return pl.pallas_call(
            _rowsum_kernel,
            out_shape=jax.ShapeDtypeStruct((B, 1), x.dtype),
            grid_spec=pltpu.PrefetchScalarGridSpec(
                num_scalar_prefetch=0,
                grid=(nt,),
                in_specs=[
                    pl.BlockSpec((tb, K), lambda i: (i, 0)),
                    pl.BlockSpec((1, K), lambda i: (0, 0)),
                ],
                out_specs=pl.BlockSpec((tb, 1), lambda i: (i, 0)),
            ),
            compiler_params=pltpu.CompilerParams(
                dimension_semantics=("parallel",),
                vmem_limit_bytes=_VMEM_LIMIT_BYTES,
            ),
            cost_estimate=cost,
        )(x, w_sum)

    # K is tiled: innermost reduction axis with a resident VMEM accumulator.
    assert K % tk == 0 and tk % 128 == 0, (K, tk)
    return pl.pallas_call(
        _rowsum_kernel_ktiled,
        out_shape=jax.ShapeDtypeStruct((B, 1), x.dtype),
        grid_spec=pltpu.PrefetchScalarGridSpec(
            num_scalar_prefetch=0,
            grid=(nt, nk),
            in_specs=[
                pl.BlockSpec((tb, tk), lambda i, k: (i, k)),
                pl.BlockSpec((1, tk), lambda i, k: (0, k)),
            ],
            out_specs=pl.BlockSpec((tb, 1), lambda i, k: (i, 0)),
            scratch_shapes=[pltpu.VMEM((tb, 128), jnp.float32)],
        ),
        compiler_params=pltpu.CompilerParams(
            dimension_semantics=("parallel", "arbitrary"),
            vmem_limit_bytes=_VMEM_LIMIT_BYTES,
        ),
        cost_estimate=cost,
    )(x, w_sum)


if __name__ == "__main__":
    def _ref(x, w, s):
        return jnp.sum((x @ w.T) / 2.0, axis=1, keepdims=True) * s

    scaling_factor = 1.5

    # 1) Shapes implied by the PyTorch module's harness.
    batch_size, input_size, hidden_size = 8, 32, 16
    kx, kw = jax.random.split(jax.random.PRNGKey(0))
    x = jax.random.normal(kx, (batch_size, input_size), dtype=jnp.float32)
    w = jax.random.normal(kw, (hidden_size, input_size), dtype=jnp.float32)
    out = jax.block_until_ready(fused_matmul_sum_scale(x, w, scaling_factor))
    assert out.shape == (batch_size, 1)
    assert jnp.allclose(out, _ref(x, w, scaling_factor), atol=1e-4, rtol=1e-4)

    # 2) Non-dividing batch: exercises the cdiv boundary block.
    kx2, kw2 = jax.random.split(jax.random.PRNGKey(1))
    x2 = jax.random.normal(kx2, (20, 32), dtype=jnp.float32)
    w2 = jax.random.normal(kw2, (16, 32), dtype=jnp.float32)
    out2 = jax.block_until_ready(
        fused_matmul_sum_scale(x2, w2, scaling_factor, block_rows=8))
    assert jnp.allclose(out2, _ref(x2, w2, scaling_factor), atol=1e-4, rtol=1e-4)

    # 3) Forced small tiles: exercises the K-tiled accumulator kernel.
    kx3, kw3 = jax.random.split(jax.random.PRNGKey(2))
    x3 = jax.random.normal(kx3, (32, 512), dtype=jnp.float32)
    w3 = jax.random.normal(kw3, (16, 512), dtype=jnp.float32)
    out3 = jax.block_until_ready(
        fused_matmul_sum_scale(x3, w3, scaling_factor, block_rows=16, block_k=256))
    assert jnp.allclose(out3, _ref(x3, w3, scaling_factor), atol=1e-3, rtol=1e-3)

    print("KERNEL_OK")
</pallas_src>

<mosaic_0001>
module attributes {stable_mosaic.version = 11 : i64} {
  func.func @_rowsum_kernel(%arg0: i32, %arg1: memref<8x32xf32, #tpu.memory_space<vmem>>, %arg2: memref<1x32xf32, #tpu.memory_space<vmem>>, %arg3: memref<8x1xf32, #tpu.memory_space<vmem>>) attributes {dimension_semantics = [#tpu.dimension_semantics<parallel>], iteration_bounds = array<i64: 1>, scalar_prefetch = 0 : i64, scratch_operands = 0 : i64, tpu.core_type = #tpu.core_type<tc>, window_params = [{transform_indices = @transform_0, window_bounds = array<i64: 8, 32>}, {pipeline_mode = #tpu.pipeline_mode<synchronous>, transform_indices = @transform_1, window_bounds = array<i64: 1, 32>}, {transform_indices = @transform_2, window_bounds = array<i64: 8, 1>}]} {
    %c0 = arith.constant 0 : index
    %c0_0 = arith.constant 0 : index
    %0 = vector.load %arg1[%c0, %c0_0] : memref<8x32xf32, #tpu.memory_space<vmem>>, vector<8x32xf32>
    %c0_1 = arith.constant 0 : index
    %c0_2 = arith.constant 0 : index
    %1 = vector.load %arg2[%c0_1, %c0_2] : memref<1x32xf32, #tpu.memory_space<vmem>>, vector<1x32xf32>
    %2 = vector.broadcast %1 : vector<1x32xf32> to vector<8x32xf32>
    %3 = arith.mulf %0, %2 : vector<8x32xf32>
    %cst = arith.constant dense<0.000000e+00> : vector<8xf32>
    %4 = vector.multi_reduction <add>, %3, %cst [1] : vector<8x32xf32> to vector<8xf32>
    %5 = vector.shape_cast %4 : vector<8xf32> to vector<8x1xf32>
    %c0_3 = arith.constant 0 : index
    %c0_4 = arith.constant 0 : index
    %6 = vector.load %arg3[%c0_3, %c0_4] : memref<8x1xf32, #tpu.memory_space<vmem>>, vector<8x1xf32>
    tpu.vector_store %arg3[%c0_3, %c0_4], %5 {strides = array<i32>} : memref<8x1xf32, #tpu.memory_space<vmem>>, vector<8x1xf32>,
    return
  }
  func.func @transform_0(%arg0: i32) -> (i32, i32) {
    %c0_i32 = arith.constant 0 : i32
    %c0_i32_0 = arith.constant 0 : i32
    return %arg0, %c0_i32 : i32, i32
  }
  func.func @transform_1(%arg0: i32) -> (i32, i32) {
    %c0_i32 = arith.constant 0 : i32
    %c0_i32_0 = arith.constant 0 : i32
    %c0_i32_1 = arith.constant 0 : i32
    return %c0_i32, %c0_i32_0 : i32, i32
  }
  func.func @transform_2(%arg0: i32) -> (i32, i32) {
    %c0_i32 = arith.constant 0 : i32
    %c0_i32_0 = arith.constant 0 : i32
    return %arg0, %c0_i32 : i32, i32
  }
}

</mosaic_0001>

<llo_original>
// kernel: tpu_custom_call.1
$region0: #{tpu_custom_call.1}
  #allocation0 [shape = 'u32[]', space=smem, size = 0x4, offset = 0x4, fixed_abs, tag = 'smem constant byte address 0x4 - core index']
  #allocation1 [shape = 'u32[144,128]{1,0:T(1,128)}', space=vmem, size = 0x12000, scoped, tag = 'internal scratch']
  %s0 = inlined_call_operand.hbm [shape: f32[8,32], index: 0, kind: input, shape index: {}]
  %s1 = inlined_call_operand.vmem [shape: f32[1,32], index: 1, kind: input, shape index: {}]
  %s2 = inlined_call_operand.vmem [shape: f32[8,1], index: 2, kind: output, shape index: {}]
  %s3 = sld [smem:[#allocation0]]
  $region22: #{tpu_custom_call.1} parent=0
    _
  %s5 = ssub.s32 1, %s3
  %s6 = scalar_select 0, %s5, %s3
  $region1: #{tpu_custom_call.1} parent=0
    #allocation2 [shape = 'u8[4096]{0}', space=vmem, size = 0x1000, scoped, tag = 'input window, operand 0, single buffered']
    #allocation3 [shape = 's32[1]{0}', space=sflag, size = 0x4, scoped, tag = 'scoped memory for tpu_custom_call.1']
    %7 = vsyncpa [#allocation3], 0
    // Predicated region
    $region2: #{tpu_custom_call.1} parent=1 // pred_check
      _
    $region3: #{tpu_custom_call.1} parent=1 // pred_check_branch
      %9 = sbr.rel (0) target = $region5
    $region4: #{tpu_custom_call.1} parent=1 // pred_region
      %s11 = ssub.s32 128, 128
      %12 = vsyncadd [#allocation3], %s11
      %s14 = sshll.u32 [#allocation2], 4
      %s15 = int_to_ptr.vmem [resolvable:$true] %s14
      %17 = dma.hbm_to_vmem [thread:$0]  %s0, 128, %s15, [#allocation3]
    $region5: #{tpu_custom_call.1} parent=1 // pred_fallthru
      _
    // Predicated region
    $region6: #{tpu_custom_call.1} parent=1 // pred_check
      _
    $region7: #{tpu_custom_call.1} parent=1 // pred_check_branch
      %19 = sbr.rel (0) target = $region9
    $region8: #{tpu_custom_call.1} parent=1 // pred_region
      _
    $region9: #{tpu_custom_call.1} parent=1 // pred_fallthru
      _
    // Predicated region
    $region10: #{tpu_custom_call.1} parent=1 // pred_check
      _
    $region11: #{tpu_custom_call.1} parent=1 // pred_check_branch
      %21 = sbr.rel (0) target = $region13
    $region12: #{tpu_custom_call.1} parent=1 // pred_region
      %22 = dma.done [#allocation3], 128
    $region13: #{tpu_custom_call.1} parent=1 // pred_fallthru
      _
    %v23 = vld [vmem:[#allocation2] sm:$0xff]
    %v24 = vld [vmem:[%s1] sm:$0x1]
    %v26 = vlaneseq
    %v27 = vshrl.u32 %v26, 7
    %v28 = vsub.s32 0, %v27
    %v29 = vrot.slane %v24, %v28
    %v31 = vmul.f32 %v23, %v29
    %vm32 = vcmask 261120
    %v33 = vsel %vm32, %v31, 0.0
    %34 = vadd.xlane.f32.xlu0 %v33
    %v35 = vpop.xlane.xlu0 %34
    %vm36 = vcmask 7168
    %37 = vst.msk [vmem:[%s2] sm:$0xff] %vm36, %v35
    // Predicated region
    $region14: #{tpu_custom_call.1} parent=1 // pred_check
      _
    $region15: #{tpu_custom_call.1} parent=1 // pred_check_branch
      %39 = sbr.rel (0) target = $region17
    $region16: #{tpu_custom_call.1} parent=1 // pred_region
      _
    $region17: #{tpu_custom_call.1} parent=1 // pred_fallthru
      _
    // Predicated region
    $region18: #{tpu_custom_call.1} parent=1 // pred_check
      _
    $region19: #{tpu_custom_call.1} parent=1 // pred_check_branch
      %41 = sbr.rel (0) target = $region21
    $region20: #{tpu_custom_call.1} parent=1 // pred_region
      _
    $region21: #{tpu_custom_call.1} parent=1 // pred_fallthru
      _
    %42 = vsyncpa [#allocation3], 1

</llo_original>
